<compile_context>
chip_gen: v7x
topology: tpu7x:2x2x1
jax: 0.10.0
libtpu: 0.0.40
codegen_flags: <defaults>
</compile_context>

<pallas_src>
import jax
import jax.numpy as jnp
from jax.experimental import pallas as pl
from jax.experimental.pallas import tpu as pltpu

LANE = 128  # TPU lane width


def _round_up(n, m):
    return ((n + m - 1) // m) * m


def _discriminator_kernel(x_ref, w1_ref, b1_ref, w2_ref, b2_ref, w3_ref, b3_ref,
                          out_ref):
    # fc1: MXU matmul (bf16 or f32 inputs, f32 accumulate) + leaky_relu(0.2).
    h1 = jnp.dot(x_ref[...], w1_ref[...], preferred_element_type=jnp.float32)
    h1 = h1 + b1_ref[...]
    h1 = jnp.where(h1 > 0, h1, 0.2 * h1)

    # fc2: cast activations to the weight dtype (bf16 on the fast path).
    h2 = jnp.dot(h1.astype(w2_ref.dtype), w2_ref[...],
                 preferred_element_type=jnp.float32)
    h2 = h2 + b2_ref[...]
    h2 = jnp.where(h2 > 0, h2, 0.2 * h2)

    # fc3 (out_features == 1): a K=32, N=1 matmul would waste the MXU and pay a
    # full push/drain; do a lane-wise multiply + cross-lane reduce instead.
    h3 = jnp.sum(h2 * w3_ref[...], axis=-1, keepdims=True) + b3_ref[...]
    out_ref[...] = jax.nn.sigmoid(h3)


def discriminator_forward(x_nchw, params, *, tile_b=None, use_bf16=True):
    """Pallas TPU forward of the GAN Discriminator.

    x_nchw: (B, C, H, W) float32.
    params: w1 (in,h2), b1 (1,h2), w2 (h2,h1), b2 (1,h1), w3 (h1,1), b3 (1,1).
    Returns (B, 1) float32.
    """
    B = x_nchw.shape[0]
    x_flat = x_nchw.reshape(B, -1)          # same order as torch .view on NCHW
    in_dim = x_flat.shape[1]

    w1, b1 = params["w1"], params["b1"]
    w2, b2 = params["w2"], params["b2"]
    w3, b3 = params["w3"], params["b3"]
    h2_dim, h1_dim = w1.shape[1], w2.shape[1]

    # Zero-pad hidden dims to the 128-lane width; zeros propagate as zeros
    # through bias-add (padded bias = 0), leaky_relu, the next matmul (padded
    # weight rows = 0) and the final reduction (padded w3 = 0), so results are
    # bit-identical to the unpadded math.
    h2p = _round_up(h2_dim, LANE)
    h1p = _round_up(h1_dim, LANE)
    mat_dtype = jnp.bfloat16 if use_bf16 else jnp.float32

    w1p = jnp.pad(w1, ((0, 0), (0, h2p - h2_dim))).astype(mat_dtype)
    b1p = jnp.pad(b1, ((0, 0), (0, h2p - h2_dim))).astype(jnp.float32)
    w2p = jnp.pad(w2, ((0, h2p - h2_dim), (0, h1p - h1_dim))).astype(mat_dtype)
    b2p = jnp.pad(b2, ((0, 0), (0, h1p - h1_dim))).astype(jnp.float32)
    w3row = jnp.pad(w3.reshape(1, h1_dim),
                    ((0, 0), (0, h1p - h1_dim))).astype(jnp.float32)
    b3r = b3.reshape(1, 1).astype(jnp.float32)

    # Batch tiling: TILE_B a multiple of 16 (bf16 sublane packing). Default 512
    # keeps the double-buffered x tile (+ resident weights) well inside the
    # 32 MiB default scoped VMEM even on v7x (64 MiB physical).
    if tile_b is None:
        tile_b = 512 if B >= 512 else _round_up(max(B, 1), 16)
    b_pad = _round_up(B, tile_b)
    x_p = jnp.pad(x_flat, ((0, b_pad - B), (0, 0))).astype(mat_dtype)

    grid = (b_pad // tile_b,)
    resident = lambda i: (0, 0)   # weights/biases: same block every grid step

    bpe = 2 if use_bf16 else 4
    cost = pl.CostEstimate(
        flops=2 * b_pad * (in_dim * h2p + h2p * h1p + h1p),
        transcendentals=b_pad,    # one sigmoid per row
        bytes_accessed=(x_p.size * bpe + (w1p.size + w2p.size) * bpe
                        + (b1p.size + b2p.size + w3row.size + b3r.size) * 4
                        + b_pad * 4),
    )

    out = pl.pallas_call(
        _discriminator_kernel,
        out_shape=jax.ShapeDtypeStruct((b_pad, 1), jnp.float32),
        grid=grid,
        in_specs=[
            pl.BlockSpec((tile_b, in_dim), lambda i: (i, 0)),  # x: pipelined
            pl.BlockSpec((in_dim, h2p), resident),             # w1
            pl.BlockSpec((1, h2p), resident),                  # b1
            pl.BlockSpec((h2p, h1p), resident),                # w2
            pl.BlockSpec((1, h1p), resident),                  # b2
            pl.BlockSpec((1, h1p), resident),                  # w3 as a row
            pl.BlockSpec((1, 1), resident),                    # b3
        ],
        out_specs=pl.BlockSpec((tile_b, 1), lambda i: (i, 0)),
        compiler_params=pltpu.CompilerParams(
            dimension_semantics=("parallel",)),  # megacore-shardable on v7x
        cost_estimate=cost,
    )(x_p, w1p, b1p, w2p, b2p, w3row, b3r)

    return out[:B]


def init_params(key, in_dim, h_dim_2, h_dim_1):
    """Deterministic synthetic parameters.  Weights are (in, out)."""
    k1, k2, k3, k4, k5, k6 = jax.random.split(key, 6)
    s1 = 1.0 / jnp.sqrt(in_dim)
    s2 = 1.0 / jnp.sqrt(h_dim_2)
    s3 = 1.0 / jnp.sqrt(h_dim_1)
    return {
        "w1": jax.random.uniform(k1, (in_dim, h_dim_2), jnp.float32, -s1, s1),
        "b1": jax.random.uniform(k2, (1, h_dim_2), jnp.float32, -s1, s1),
        "w2": jax.random.uniform(k3, (h_dim_2, h_dim_1), jnp.float32, -s2, s2),
        "b2": jax.random.uniform(k4, (1, h_dim_1), jnp.float32, -s2, s2),
        "w3": jax.random.uniform(k5, (h_dim_1, 1), jnp.float32, -s3, s3),
        "b3": jax.random.uniform(k6, (1, 1), jnp.float32, -s3, s3),
    }


def reference_forward(x_nchw, params):
    """Pure-JAX f32 reference."""
    B = x_nchw.shape[0]
    x = x_nchw.reshape(B, -1)
    h1 = x @ params["w1"] + params["b1"]
    h1 = jnp.where(h1 > 0, h1, 0.2 * h1)
    h2 = h1 @ params["w2"] + params["b2"]
    h2 = jnp.where(h2 > 0, h2, 0.2 * h2)
    h3 = h2 @ params["w3"] + params["b3"]
    return jax.nn.sigmoid(h3)


if __name__ == "__main__":
    # Shapes consistent with the module's constructor:
    #   n_rows = n_cols = 16, n_channels = 4  ->  n_pixels * n_channels = 1024
    #   h_dim_2 = 64, h_dim_1 = 32, batch = 2
    batch, n_channels, n_rows, n_cols = 2, 4, 16, 16
    h_dim_2, h_dim_1 = 64, 32
    in_dim = n_rows * n_cols * n_channels

    key = jax.random.PRNGKey(0)
    kx, kp = jax.random.split(key)
    x = jax.random.normal(kx, (batch, n_channels, n_rows, n_cols), jnp.float32)
    params = init_params(kp, in_dim, h_dim_2, h_dim_1)

    y_ref = reference_forward(x, params)

    # Exact f32 path (validates the kernel structure: grid, padding, fc3 reduce).
    y_f32 = discriminator_forward(x, params, use_bf16=False)
    jax.block_until_ready(y_f32)
    assert y_f32.shape == (batch, 1)
    assert jnp.allclose(y_f32, y_ref, atol=1e-5, rtol=1e-5)

    # Default fast path: bf16 MXU inputs, f32 accumulation (loosened tolerance).
    y = discriminator_forward(x, params)
    jax.block_until_ready(y)
    assert y.shape == (batch, 1)
    assert jnp.allclose(y, y_ref, atol=2e-2, rtol=2e-2)

    print("KERNEL_OK")
</pallas_src>

<mosaic_0001>
module attributes {stable_mosaic.version = 11 : i64} {
  func.func @_discriminator_kernel(%arg0: i32, %arg1: memref<16x1024xf32, #tpu.memory_space<vmem>>, %arg2: memref<1024x128xf32, #tpu.memory_space<vmem>>, %arg3: memref<1x128xf32, #tpu.memory_space<vmem>>, %arg4: memref<128x128xf32, #tpu.memory_space<vmem>>, %arg5: memref<1x128xf32, #tpu.memory_space<vmem>>, %arg6: memref<1x128xf32, #tpu.memory_space<vmem>>, %arg7: memref<1x1xf32, #tpu.memory_space<vmem>>, %arg8: memref<16x1xf32, #tpu.memory_space<vmem>>) attributes {dimension_semantics = [#tpu.dimension_semantics<parallel>], iteration_bounds = array<i64: 1>, scalar_prefetch = 0 : i64, scratch_operands = 0 : i64, tpu.core_type = #tpu.core_type<tc>, window_params = [{transform_indices = @transform_0, window_bounds = array<i64: 16, 1024>}, {pipeline_mode = #tpu.pipeline_mode<synchronous>, transform_indices = @transform_1, window_bounds = array<i64: 1024, 128>}, {pipeline_mode = #tpu.pipeline_mode<synchronous>, transform_indices = @transform_2, window_bounds = array<i64: 1, 128>}, {pipeline_mode = #tpu.pipeline_mode<synchronous>, transform_indices = @transform_3, window_bounds = array<i64: 128, 128>}, {pipeline_mode = #tpu.pipeline_mode<synchronous>, transform_indices = @transform_4, window_bounds = array<i64: 1, 128>}, {pipeline_mode = #tpu.pipeline_mode<synchronous>, transform_indices = @transform_5, window_bounds = array<i64: 1, 128>}, {pipeline_mode = #tpu.pipeline_mode<synchronous>, transform_indices = @transform_6, window_bounds = array<i64: 1, 1>}, {transform_indices = @transform_7, window_bounds = array<i64: 16, 1>}]} {
    %c0 = arith.constant 0 : index
    %c0_0 = arith.constant 0 : index
    %0 = vector.load %arg1[%c0, %c0_0] : memref<16x1024xf32, #tpu.memory_space<vmem>>, vector<16x1024xf32>
    %c0_1 = arith.constant 0 : index
    %c0_2 = arith.constant 0 : index
    %1 = vector.load %arg2[%c0_1, %c0_2] : memref<1024x128xf32, #tpu.memory_space<vmem>>, vector<1024x128xf32>
    %cst = arith.constant dense<0.000000e+00> : vector<16x128xf32>
    %2 = tpu.matmul %0, %1, %cst {dimension_numbers = #tpu.dot_dimension_numbers<[1], [0], [0], [1], [0, 0, 1, 1], [], []>} : vector<16x1024xf32>, vector<1024x128xf32>, vector<16x128xf32> -> vector<16x128xf32>
    %c0_3 = arith.constant 0 : index
    %c0_4 = arith.constant 0 : index
    %3 = vector.load %arg3[%c0_3, %c0_4] : memref<1x128xf32, #tpu.memory_space<vmem>>, vector<1x128xf32>
    %4 = vector.broadcast %3 : vector<1x128xf32> to vector<16x128xf32>
    %5 = arith.addf %2, %4 : vector<16x128xf32>
    %cst_5 = arith.constant 0.000000e+00 : f32
    %6 = vector.broadcast %cst_5 : f32 to vector<16x128xf32>
    %7 = arith.cmpf ogt, %5, %6 : vector<16x128xf32>
    %cst_6 = arith.constant 2.000000e-01 : f32
    %8 = vector.broadcast %cst_6 : f32 to vector<16x128xf32>
    %9 = arith.mulf %8, %5 : vector<16x128xf32>
    %10 = arith.select %7, %5, %9 : vector<16x128xi1>, vector<16x128xf32>
    %c0_7 = arith.constant 0 : index
    %c0_8 = arith.constant 0 : index
    %11 = vector.load %arg4[%c0_7, %c0_8] : memref<128x128xf32, #tpu.memory_space<vmem>>, vector<128x128xf32>
    %cst_9 = arith.constant dense<0.000000e+00> : vector<16x128xf32>
    %12 = tpu.matmul %10, %11, %cst_9 {dimension_numbers = #tpu.dot_dimension_numbers<[1], [0], [0], [1], [0, 0, 1, 1], [], []>} : vector<16x128xf32>, vector<128x128xf32>, vector<16x128xf32> -> vector<16x128xf32>
    %c0_10 = arith.constant 0 : index
    %c0_11 = arith.constant 0 : index
    %13 = vector.load %arg5[%c0_10, %c0_11] : memref<1x128xf32, #tpu.memory_space<vmem>>, vector<1x128xf32>
    %14 = vector.broadcast %13 : vector<1x128xf32> to vector<16x128xf32>
    %15 = arith.addf %12, %14 : vector<16x128xf32>
    %cst_12 = arith.constant 0.000000e+00 : f32
    %16 = vector.broadcast %cst_12 : f32 to vector<16x128xf32>
    %17 = arith.cmpf ogt, %15, %16 : vector<16x128xf32>
    %cst_13 = arith.constant 2.000000e-01 : f32
    %18 = vector.broadcast %cst_13 : f32 to vector<16x128xf32>
    %19 = arith.mulf %18, %15 : vector<16x128xf32>
    %20 = arith.select %17, %15, %19 : vector<16x128xi1>, vector<16x128xf32>
    %c0_14 = arith.constant 0 : index
    %c0_15 = arith.constant 0 : index
    %21 = vector.load %arg6[%c0_14, %c0_15] : memref<1x128xf32, #tpu.memory_space<vmem>>, vector<1x128xf32>
    %22 = vector.broadcast %21 : vector<1x128xf32> to vector<16x128xf32>
    %23 = arith.mulf %20, %22 : vector<16x128xf32>
    %cst_16 = arith.constant dense<0.000000e+00> : vector<16xf32>
    %24 = vector.multi_reduction <add>, %23, %cst_16 [1] : vector<16x128xf32> to vector<16xf32>
    %25 = vector.shape_cast %24 : vector<16xf32> to vector<16x1xf32>
    %c0_17 = arith.constant 0 : index
    %c0_18 = arith.constant 0 : index
    %26 = vector.load %arg7[%c0_17, %c0_18] : memref<1x1xf32, #tpu.memory_space<vmem>>, vector<1x1xf32>
    %27 = vector.broadcast %26 : vector<1x1xf32> to vector<16x1xf32>
    %28 = arith.addf %25, %27 : vector<16x1xf32>
    %29 = arith.negf %28 : vector<16x1xf32>
    %30 = math.exp %29 : vector<16x1xf32>
    %cst_19 = arith.constant 1.000000e+00 : f32
    %31 = vector.broadcast %cst_19 : f32 to vector<16x1xf32>
    %32 = arith.addf %31, %30 : vector<16x1xf32>
    %33 = arith.divf %31, %32 : vector<16x1xf32>
    %c0_20 = arith.constant 0 : index
    %c0_21 = arith.constant 0 : index
    %34 = vector.load %arg8[%c0_20, %c0_21] : memref<16x1xf32, #tpu.memory_space<vmem>>, vector<16x1xf32>
    tpu.vector_store %arg8[%c0_20, %c0_21], %33 {strides = array<i32>} : memref<16x1xf32, #tpu.memory_space<vmem>>, vector<16x1xf32>,
    return
  }
  func.func @transform_0(%arg0: i32) -> (i32, i32) {
    %c0_i32 = arith.constant 0 : i32
    %c0_i32_0 = arith.constant 0 : i32
    return %arg0, %c0_i32 : i32, i32
  }
  func.func @transform_1(%arg0: i32) -> (i32, i32) {
    %c0_i32 = arith.constant 0 : i32
    %c0_i32_0 = arith.constant 0 : i32
    %c0_i32_1 = arith.constant 0 : i32
    return %c0_i32, %c0_i32_0 : i32, i32
  }
  func.func @transform_2(%arg0: i32) -> (i32, i32) {
    %c0_i32 = arith.constant 0 : i32
    %c0_i32_0 = arith.constant 0 : i32
    %c0_i32_1 = arith.constant 0 : i32
    return %c0_i32, %c0_i32_0 : i32, i32
  }
  func.func @transform_3(%arg0: i32) -> (i32, i32) {
    %c0_i32 = arith.constant 0 : i32
    %c0_i32_0 = arith.constant 0 : i32
    %c0_i32_1 = arith.constant 0 : i32
    return %c0_i32, %c0_i32_0 : i32, i32
  }
  func.func @transform_4(%arg0: i32) -> (i32, i32) {
    %c0_i32 = arith.constant 0 : i32
    %c0_i32_0 = arith.constant 0 : i32
    %c0_i32_1 = arith.constant 0 : i32
    return %c0_i32, %c0_i32_0 : i32, i32
  }
  func.func @transform_5(%arg0: i32) -> (i32, i32) {
    %c0_i32 = arith.constant 0 : i32
    %c0_i32_0 = arith.constant 0 : i32
    %c0_i32_1 = arith.constant 0 : i32
    return %c0_i32, %c0_i32_0 : i32, i32
  }
  func.func @transform_6(%arg0: i32) -> (i32, i32) {
    %c0_i32 = arith.constant 0 : i32
    %c0_i32_0 = arith.constant 0 : i32
    %c0_i32_1 = arith.constant 0 : i32
    return %c0_i32, %c0_i32_0 : i32, i32
  }
  func.func @transform_7(%arg0: i32) -> (i32, i32) {
    %c0_i32 = arith.constant 0 : i32
    %c0_i32_0 = arith.constant 0 : i32
    return %arg0, %c0_i32 : i32, i32
  }
}

</mosaic_0001>

<llo_original>
// kernel: tpu_custom_call.1
$region0: #{tpu_custom_call.1}
  #allocation0 [shape = 'u32[]', space=smem, size = 0x4, offset = 0x4, fixed_abs, tag = 'smem constant byte address 0x4 - core index']
  #allocation1 [shape = 'u32[144,128]{1,0:T(1,128)}', space=vmem, size = 0x12000, scoped, tag = 'internal scratch']
  #allocation2 [shape = 'f32[1,1]{1,0:T(1,128)S(1)}', space=vmem, size = 0x200, scoped, tag = 'scoped memory for tpu_custom_call.1']
  %s0 = inlined_call_operand.hbm [shape: f32[16,1024], index: 0, kind: input, shape index: {}]
  %s1 = inlined_call_operand.hbm [shape: f32[1024,128], index: 1, kind: input, shape index: {}]
  %s2 = inlined_call_operand.vmem [shape: f32[1,128], index: 2, kind: input, shape index: {}]
  %s3 = inlined_call_operand.hbm [shape: f32[128,128], index: 3, kind: input, shape index: {}]
  %s4 = inlined_call_operand.vmem [shape: f32[1,128], index: 4, kind: input, shape index: {}]
  %s5 = inlined_call_operand.vmem [shape: f32[1,128], index: 5, kind: input, shape index: {}]
  %s6 = inlined_call_operand.<no memory space> [shape: f32[1,1], index: 6, kind: input, shape index: {}]
  %s7 = inlined_call_operand.vmem [shape: f32[16,1], index: 7, kind: output, shape index: {}]
  %s8 = sld [smem:[#allocation0]]
  $region50: #{tpu_custom_call.1} parent=0
    _
  %s10 = ssub.s32 1, %s8
  %s11 = scalar_select 0, %s10, %s8
  %v12 = vstv %s6
  %13 = vst [vmem:[#allocation2] sm:$0x1] %v12
  $region1: #{tpu_custom_call.1} parent=0
    #allocation3 [shape = 'u8[65536]{0}', space=vmem, size = 0x10000, scoped, tag = 'input window, operand 0, single buffered']
    #allocation4 [shape = 's32[1]{0}', space=sflag, size = 0x4, scoped, tag = 'scoped memory for tpu_custom_call.1']
    #allocation5 [shape = 'u8[524288]{0}', space=vmem, size = 0x80000, scoped, tag = 'input window, operand 1, single buffered']
    #allocation6 [shape = 's32[1]{0}', space=sflag, size = 0x4, scoped, tag = 'scoped memory for tpu_custom_call.1']
    #allocation7 [shape = 'u8[65536]{0}', space=vmem, size = 0x10000, scoped, tag = 'input window, operand 3, single buffered']
    %14 = vsyncpa [#allocation4], 0
    %15 = vsyncpa [#allocation6], 0
    // Predicated region
    $region2: #{tpu_custom_call.1} parent=1 // pred_check
      _
    $region3: #{tpu_custom_call.1} parent=1 // pred_check_branch
      %17 = sbr.rel (0) target = $region5
    $region4: #{tpu_custom_call.1} parent=1 // pred_region
      %s19 = ssub.s32 2048, 2048
      %20 = vsyncadd [#allocation4], %s19
      %s21 = sshll.u32 [#allocation3], 4
      %s22 = int_to_ptr.vmem [resolvable:$true] %s21
      %27 = dma.hbm_to_vmem [thread:$0]  %s0, 2048, %s22, [#allocation4], 1024, 1024, 64
    $region5: #{tpu_custom_call.1} parent=1 // pred_fallthru
      _
    // Predicated region
    $region6: #{tpu_custom_call.1} parent=1 // pred_check
      _
    $region7: #{tpu_custom_call.1} parent=1 // pred_check_branch
      %29 = sbr.rel (0) target = $region9
    $region8: #{tpu_custom_call.1} parent=1 // pred_region
      %s31 = ssub.s32 16384, 16384
      %32 = vsyncadd [#allocation6], %s31
      %s33 = sshll.u32 [#allocation5], 4
      %s34 = int_to_ptr.vmem [resolvable:$true] %s33
      %39 = dma.hbm_to_vmem [thread:$0]  %s1, 16384, %s34, [#allocation6], 128, 128, 8
    $region9: #{tpu_custom_call.1} parent=1 // pred_fallthru
      _
    // Predicated region
    $region10: #{tpu_custom_call.1} parent=1 // pred_check
      _
    $region11: #{tpu_custom_call.1} parent=1 // pred_check_branch
      %41 = sbr.rel (0) target = $region13
    $region12: #{tpu_custom_call.1} parent=1 // pred_region
      _
    $region13: #{tpu_custom_call.1} parent=1 // pred_fallthru
      _
    // Predicated region
    $region14: #{tpu_custom_call.1} parent=1 // pred_check
      _
    $region15: #{tpu_custom_call.1} parent=1 // pred_check_branch
      %43 = sbr.rel (0) target = $region17
    $region16: #{tpu_custom_call.1} parent=1 // pred_region
      %s45 = ssub.s32 2048, 2048
      %46 = vsyncadd [#allocation6], %s45
      %s47 = sshll.u32 [#allocation7], 4
      %s48 = int_to_ptr.vmem [resolvable:$true] %s47
      %53 = dma.hbm_to_vmem [thread:$0]  %s3, 2048, %s48, [#allocation6], 128, 128, 8
    $region17: #{tpu_custom_call.1} parent=1 // pred_fallthru
      _
    // Predicated region
    $region18: #{tpu_custom_call.1} parent=1 // pred_check
      _
    $region19: #{tpu_custom_call.1} parent=1 // pred_check_branch
      %55 = sbr.rel (0) target = $region21
    $region20: #{tpu_custom_call.1} parent=1 // pred_region
      _
    $region21: #{tpu_custom_call.1} parent=1 // pred_fallthru
      _
    // Predicated region
    $region22: #{tpu_custom_call.1} parent=1 // pred_check
      _
    $region23: #{tpu_custom_call.1} parent=1 // pred_check_branch
      %57 = sbr.rel (0) target = $region25
    $region24: #{tpu_custom_call.1} parent=1 // pred_region
      _
    $region25: #{tpu_custom_call.1} parent=1 // pred_fallthru
      _
    // Predicated region
    $region26: #{tpu_custom_call.1} parent=1 // pred_check
      _
    $region27: #{tpu_custom_call.1} parent=1 // pred_check_branch
      %59 = sbr.rel (0) target = $region29
    $region28: #{tpu_custom_call.1} parent=1 // pred_region
      _
    $region29: #{tpu_custom_call.1} parent=1 // pred_fallthru
      _
    // Predicated region
    $region30: #{tpu_custom_call.1} parent=1 // pred_check
      _
    $region31: #{tpu_custom_call.1} parent=1 // pred_check_branch
      %61 = sbr.rel (0) target = $region33
    $region32: #{tpu_custom_call.1} parent=1 // pred_region
      %62 = dma.done [#allocation4], 2048
    $region33: #{tpu_custom_call.1} parent=1 // pred_fallthru
      _
    // Predicated region
    $region34: #{tpu_custom_call.1} parent=1 // pred_check
      _
    $region35: #{tpu_custom_call.1} parent=1 // pred_check_branch
      %64 = sbr.rel (0) target = $region37
    $region36: #{tpu_custom_call.1} parent=1 // pred_region
      %65 = dma.done [#allocation6], 16384
    $region37: #{tpu_custom_call.1} parent=1 // pred_fallthru
      _
    // Predicated region
    $region38: #{tpu_custom_call.1} parent=1 // pred_check
      _
    $region39: #{tpu_custom_call.1} parent=1 // pred_check_branch
      %67 = sbr.rel (0) target = $region41
    $region40: #{tpu_custom_call.1} parent=1 // pred_region
      %68 = dma.done [#allocation6], 2048
    $region41: #{tpu_custom_call.1} parent=1 // pred_fallthru
      _
    %v69 = vld [vmem:[#allocation3] sm:$0xff]
    %v70 = vld [vmem:[#allocation3 + $0x8] sm:$0xff]
    %v71 = vld [vmem:[#allocation3 + $0x10] sm:$0xff]
    %v72 = vld [vmem:[#allocation3 + $0x18] sm:$0xff]
    %v73 = vld [vmem:[#allocation3 + $0x20] sm:$0xff]
    %v74 = vld [vmem:[#allocation3 + $0x28] sm:$0xff]
    %v75 = vld [vmem:[#allocation3 + $0x30] sm:$0xff]
    %v76 = vld [vmem:[#allocation3 + $0x38] sm:$0xff]
    %v77 = vld [vmem:[#allocation3 + $0x40] sm:$0xff]
    %v78 = vld [vmem:[#allocation3 + $0x48] sm:$0xff]
    %v79 = vld [vmem:[#allocation3 + $0x50] sm:$0xff]
    %v80 = vld [vmem:[#allocation3 + $0x58] sm:$0xff]
    %v81 = vld [vmem:[#allocation3 + $0x60] sm:$0xff]
    %v82 = vld [vmem:[#allocation3 + $0x68] sm:$0xff]
    %v83 = vld [vmem:[#allocation3 + $0x70] sm:$0xff]
    %v84 = vld [vmem:[#allocation3 + $0x78] sm:$0xff]
    %v85 = vld [vmem:[#allocation5] sm:$0xff]
    %v86 = vld [vmem:[#allocation5 + $0x8] sm:$0xff]
    %v87 = vld [vmem:[#allocation5 + $0x10] sm:$0xff]
    %v88 = vld [vmem:[#allocation5 + $0x18] sm:$0xff]
    %v89 = vld [vmem:[#allocation5 + $0x20] sm:$0xff]
    %v90 = vld [vmem:[#allocation5 + $0x28] sm:$0xff]
    %v91 = vld [vmem:[#allocation5 + $0x30] sm:$0xff]
    %v92 = vld [vmem:[#allocation5 + $0x38] sm:$0xff]
    %v93 = vld [vmem:[#allocation5 + $0x40] sm:$0xff]
    %v94 = vld [vmem:[#allocation5 + $0x48] sm:$0xff]
    %v95 = vld [vmem:[#allocation5 + $0x50] sm:$0xff]
    %v96 = vld [vmem:[#allocation5 + $0x58] sm:$0xff]
    %v97 = vld [vmem:[#allocation5 + $0x60] sm:$0xff]
    %v98 = vld [vmem:[#allocation5 + $0x68] sm:$0xff]
    %v99 = vld [vmem:[#allocation5 + $0x70] sm:$0xff]
    %v100 = vld [vmem:[#allocation5 + $0x78] sm:$0xff]
    %v101 = vld [vmem:[#allocation5 + $0x80] sm:$0xff]
    %v102 = vld [vmem:[#allocation5 + $0x88] sm:$0xff]
    %v103 = vld [vmem:[#allocation5 + $0x90] sm:$0xff]
    %v104 = vld [vmem:[#allocation5 + $0x98] sm:$0xff]
    %v105 = vld [vmem:[#allocation5 + $0xa0] sm:$0xff]
    %v106 = vld [vmem:[#allocation5 + $0xa8] sm:$0xff]
    %v107 = vld [vmem:[#allocation5 + $0xb0] sm:$0xff]
    %v108 = vld [vmem:[#allocation5 + $0xb8] sm:$0xff]
    %v109 = vld [vmem:[#allocation5 + $0xc0] sm:$0xff]
    %v110 = vld [vmem:[#allocation5 + $0xc8] sm:$0xff]
    %v111 = vld [vmem:[#allocation5 + $0xd0] sm:$0xff]
    %v112 = vld [vmem:[#allocation5 + $0xd8] sm:$0xff]
    %v113 = vld [vmem:[#allocation5 + $0xe0] sm:$0xff]
    %v114 = vld [vmem:[#allocation5 + $0xe8] sm:$0xff]
    %v115 = vld [vmem:[#allocation5 + $0xf0] sm:$0xff]
    %v116 = vld [vmem:[#allocation5 + $0xf8] sm:$0xff]
    %v117 = vld [vmem:[#allocation5 + $0x100] sm:$0xff]
    %v118 = vld [vmem:[#allocation5 + $0x108] sm:$0xff]
    %v119 = vld [vmem:[#allocation5 + $0x110] sm:$0xff]
    %v120 = vld [vmem:[#allocation5 + $0x118] sm:$0xff]
    %v121 = vld [vmem:[#allocation5 + $0x120] sm:$0xff]
    %v122 = vld [vmem:[#allocation5 + $0x128] sm:$0xff]
    %v123 = vld [vmem:[#allocation5 + $0x130] sm:$0xff]
    %v124 = vld [vmem:[#allocation5 + $0x138] sm:$0xff]
    %v125 = vld [vmem:[#allocation5 + $0x140] sm:$0xff]
    %v126 = vld [vmem:[#allocation5 + $0x148] sm:$0xff]
    %v127 = vld [vmem:[#allocation5 + $0x150] sm:$0xff]
    %v128 = vld [vmem:[#allocation5 + $0x158] sm:$0xff]
    %v129 = vld [vmem:[#allocation5 + $0x160] sm:$0xff]
    %v130 = vld [vmem:[#allocation5 + $0x168] sm:$0xff]
    %v131 = vld [vmem:[#allocation5 + $0x170] sm:$0xff]
    %v132 = vld [vmem:[#allocation5 + $0x178] sm:$0xff]
    %v133 = vld [vmem:[#allocation5 + $0x180] sm:$0xff]
    %v134 = vld [vmem:[#allocation5 + $0x188] sm:$0xff]
    %v135 = vld [vmem:[#allocation5 + $0x190] sm:$0xff]
    %v136 = vld [vmem:[#allocation5 + $0x198] sm:$0xff]
    %v137 = vld [vmem:[#allocation5 + $0x1a0] sm:$0xff]
    %v138 = vld [vmem:[#allocation5 + $0x1a8] sm:$0xff]
    %v139 = vld [vmem:[#allocation5 + $0x1b0] sm:$0xff]
    %v140 = vld [vmem:[#allocation5 + $0x1b8] sm:$0xff]
    %v141 = vld [vmem:[#allocation5 + $0x1c0] sm:$0xff]
    %v142 = vld [vmem:[#allocation5 + $0x1c8] sm:$0xff]
    %v143 = vld [vmem:[#allocation5 + $0x1d0] sm:$0xff]
    %v144 = vld [vmem:[#allocation5 + $0x1d8] sm:$0xff]
    %v145 = vld [vmem:[#allocation5 + $0x1e0] sm:$0xff]
    %v146 = vld [vmem:[#allocation5 + $0x1e8] sm:$0xff]
    %v147 = vld [vmem:[#allocation5 + $0x1f0] sm:$0xff]
    %v148 = vld [vmem:[#allocation5 + $0x1f8] sm:$0xff]
    %v149 = vld [vmem:[#allocation5 + $0x200] sm:$0xff]
    %v150 = vld [vmem:[#allocation5 + $0x208] sm:$0xff]
    %v151 = vld [vmem:[#allocation5 + $0x210] sm:$0xff]
    %v152 = vld [vmem:[#allocation5 + $0x218] sm:$0xff]
    %v153 = vld [vmem:[#allocation5 + $0x220] sm:$0xff]
    %v154 = vld [vmem:[#allocation5 + $0x228] sm:$0xff]
    %v155 = vld [vmem:[#allocation5 + $0x230] sm:$0xff]
    %v156 = vld [vmem:[#allocation5 + $0x238] sm:$0xff]
    %v157 = vld [vmem:[#allocation5 + $0x240] sm:$0xff]
    %v158 = vld [vmem:[#allocation5 + $0x248] sm:$0xff]
    %v159 = vld [vmem:[#allocation5 + $0x250] sm:$0xff]
    %v160 = vld [vmem:[#allocation5 + $0x258] sm:$0xff]
    %v161 = vld [vmem:[#allocation5 + $0x260] sm:$0xff]
    %v162 = vld [vmem:[#allocation5 + $0x268] sm:$0xff]
    %v163 = vld [vmem:[#allocation5 + $0x270] sm:$0xff]
    %v164 = vld [vmem:[#allocation5 + $0x278] sm:$0xff]
    %v165 = vld [vmem:[#allocation5 + $0x280] sm:$0xff]
    %v166 = vld [vmem:[#allocation5 + $0x288] sm:$0xff]
    %v167 = vld [vmem:[#allocation5 + $0x290] sm:$0xff]
    %v168 = vld [vmem:[#allocation5 + $0x298] sm:$0xff]
    %v169 = vld [vmem:[#allocation5 + $0x2a0] sm:$0xff]
    %v170 = vld [vmem:[#allocation5 + $0x2a8] sm:$0xff]
    %v171 = vld [vmem:[#allocation5 + $0x2b0] sm:$0xff]
    %v172 = vld [vmem:[#allocation5 + $0x2b8] sm:$0xff]
    %v173 = vld [vmem:[#allocation5 + $0x2c0] sm:$0xff]
    %v174 = vld [vmem:[#allocation5 + $0x2c8] sm:$0xff]
    %v175 = vld [vmem:[#allocation5 + $0x2d0] sm:$0xff]
    %v176 = vld [vmem:[#allocation5 + $0x2d8] sm:$0xff]
    %v177 = vld [vmem:[#allocation5 + $0x2e0] sm:$0xff]
    %v178 = vld [vmem:[#allocation5 + $0x2e8] sm:$0xff]
    %v179 = vld [vmem:[#allocation5 + $0x2f0] sm:$0xff]
    %v180 = vld [vmem:[#allocation5 + $0x2f8] sm:$0xff]
    %v181 = vld [vmem:[#allocation5 + $0x300] sm:$0xff]
    %v182 = vld [vmem:[#allocation5 + $0x308] sm:$0xff]
    %v183 = vld [vmem:[#allocation5 + $0x310] sm:$0xff]
    %v184 = vld [vmem:[#allocation5 + $0x318] sm:$0xff]
    %v185 = vld [vmem:[#allocation5 + $0x320] sm:$0xff]
    %v186 = vld [vmem:[#allocation5 + $0x328] sm:$0xff]
    %v187 = vld [vmem:[#allocation5 + $0x330] sm:$0xff]
    %v188 = vld [vmem:[#allocation5 + $0x338] sm:$0xff]
    %v189 = vld [vmem:[#allocation5 + $0x340] sm:$0xff]
    %v190 = vld [vmem:[#allocation5 + $0x348] sm:$0xff]
    %v191 = vld [vmem:[#allocation5 + $0x350] sm:$0xff]
    %v192 = vld [vmem:[#allocation5 + $0x358] sm:$0xff]
    %v193 = vld [vmem:[#allocation5 + $0x360] sm:$0xff]
    %v194 = vld [vmem:[#allocation5 + $0x368] sm:$0xff]
    %v195 = vld [vmem:[#allocation5 + $0x370] sm:$0xff]
    %v196 = vld [vmem:[#allocation5 + $0x378] sm:$0xff]
    %v197 = vld [vmem:[#allocation5 + $0x380] sm:$0xff]
    %v198 = vld [vmem:[#allocation5 + $0x388] sm:$0xff]
    %v199 = vld [vmem:[#allocation5 + $0x390] sm:$0xff]
    %v200 = vld [vmem:[#allocation5 + $0x398] sm:$0xff]
    %v201 = vld [vmem:[#allocation5 + $0x3a0] sm:$0xff]
    %v202 = vld [vmem:[#allocation5 + $0x3a8] sm:$0xff]
    %v203 = vld [vmem:[#allocation5 + $0x3b0] sm:$0xff]
    %v204 = vld [vmem:[#allocation5 + $0x3b8] sm:$0xff]
    %v205 = vld [vmem:[#allocation5 + $0x3c0] sm:$0xff]
    %v206 = vld [vmem:[#allocation5 + $0x3c8] sm:$0xff]
    %v207 = vld [vmem:[#allocation5 + $0x3d0] sm:$0xff]
    %v208 = vld [vmem:[#allocation5 + $0x3d8] sm:$0xff]
    %v209 = vld [vmem:[#allocation5 + $0x3e0] sm:$0xff]
    %v210 = vld [vmem:[#allocation5 + $0x3e8] sm:$0xff]
    %v211 = vld [vmem:[#allocation5 + $0x3f0] sm:$0xff]
    %v212 = vld [vmem:[#allocation5 + $0x3f8] sm:$0xff]
    %v213 = vld [vmem:[%s2] sm:$0x1]
    %v215 = vlaneseq
    %v216 = vshrl.u32 %v215, 7
    %v217 = vsub.s32 0, %v216
    %v218 = vrot.slane %v213, %v217
    %220 = vmatprep.subr.mxu0 0.0
    %221 = vmatpush1.msra.mxu0 %v85
    %222 = vmatprep.subr.mxu0 0.0
    %223 = vmatpush1.msra.mxu0 %v86
    %224 = vmatprep.subr.mxu0 0.0
    %225 = vmatpush1.msra.mxu0 %v87
    %226 = vmatprep.subr.mxu0 0.0
    %227 = vmatpush1.msra.mxu0 %v88
    %228 = vmatprep.subr.mxu0 0.0
    %229 = vmatpush1.msra.mxu0 %v89
    %230 = vmatprep.subr.mxu0 0.0
    %231 = vmatpush1.msra.mxu0 %v90
    %232 = vmatprep.subr.mxu0 0.0
    %233 = vmatpush1.msra.mxu0 %v91
    %234 = vmatprep.subr.mxu0 0.0
    %235 = vmatpush1.msra.mxu0 %v92
    %236 = vmatprep.subr.mxu0 0.0
    %237 = vmatpush1.msra.mxu0 %v93
    %238 = vmatprep.subr.mxu0 0.0
    %239 = vmatpush1.msra.mxu0 %v94
    %240 = vmatprep.subr.mxu0 0.0
    %241 = vmatpush1.msra.mxu0 %v95
    %242 = vmatprep.subr.mxu0 0.0
    %243 = vmatpush1.msra.mxu0 %v96
    %244 = vmatprep.subr.mxu0 0.0
    %245 = vmatpush1.msra.mxu0 %v97
    %246 = vmatprep.subr.mxu0 0.0
    %247 = vmatpush1.msra.mxu0 %v98
    %248 = vmatprep.subr.mxu0 0.0
    %249 = vmatpush1.msra.mxu0 %v99
    %250 = vmatprep.subr.mxu0 0.0
    %251 = vmatpush1.msra.mxu0 %v100
    %252 = vmatprep.subr.mxu0 0.0
    %253 = vmatpush1.msra.mxu0 %v101
    %254 = vmatprep.subr.mxu0 0.0
    %255 = vmatpush1.msra.mxu0 %v102
    %256 = vmatprep.subr.mxu0 0.0
    %257 = vmatpush1.msra.mxu0 %v103
    %258 = vmatprep.subr.mxu0 0.0
    %259 = vmatpush1.msra.mxu0 %v104
    %260 = vmatprep.subr.mxu0 0.0
    %261 = vmatpush1.msra.mxu0 %v105
    %262 = vmatprep.subr.mxu0 0.0
    %263 = vmatpush1.msra.mxu0 %v106
    %264 = vmatprep.subr.mxu0 0.0
    %265 = vmatpush1.msra.mxu0 %v107
    %266 = vmatprep.subr.mxu0 0.0
    %267 = vmatpush1.msra.mxu0 %v108
    %268 = vmatprep.subr.mxu0 0.0
    %269 = vmatpush1.msra.mxu0 %v109
    %270 = vmatprep.subr.mxu0 0.0
    %271 = vmatpush1.msra.mxu0 %v110
    %272 = vmatprep.subr.mxu0 0.0
    %273 = vmatpush1.msra.mxu0 %v111
    %274 = vmatprep.subr.mxu0 0.0
    %275 = vmatpush1.msra.mxu0 %v112
    %276 = vmatprep.subr.mxu0 0.0
    %277 = vmatpush1.msra.mxu0 %v113
    %278 = vmatprep.subr.mxu0 0.0
    %279 = vmatpush1.msra.mxu0 %v114
    %280 = vmatprep.subr.mxu0 0.0
    %281 = vmatpush1.msra.mxu0 %v115
    %282 = vmatprep.subr.mxu0 0.0
    %283 = vmatpush1.msra.mxu0 %v116
    %284 = vmatprep.mubr.f32.mxu0 %v70
    %285 = vmatmul.mubr.f32.gmra.mrb[0].mxu0 %v69
    %v286 = vpop.f32.mrb[0].mxu0
    %v287 = vadd.f32 %v218, %v286
    %v288 = vpop.f32.mrb[0].mxu0
    %289 = vmatprep.mubr.f32.mxu0 %v78
    %290 = vmatmul.mubr.f32.gmra.mrb[0].mxu0 %v77
    %v291 = vpop.f32.mrb[0].mxu0
    %v292 = vadd.f32 %v218, %v291
    %v293 = vpop.f32.mrb[0].mxu0
    %294 = vdwg.mxu0
    %295 = vmatprep.subr.mxu0 0.0
    %296 = vmatpush1.msra.mxu0 %v117
    %297 = vmatprep.subr.mxu0 0.0
    %298 = vmatpush1.msra.mxu0 %v118
    %299 = vmatprep.subr.mxu0 0.0
    %300 = vmatpush1.msra.mxu0 %v119
    %301 = vmatprep.subr.mxu0 0.0
    %302 = vmatpush1.msra.mxu0 %v120
    %303 = vmatprep.subr.mxu0 0.0
    %304 = vmatpush1.msra.mxu0 %v121
    %305 = vmatprep.subr.mxu0 0.0
    %306 = vmatpush1.msra.mxu0 %v122
    %307 = vmatprep.subr.mxu0 0.0
    %308 = vmatpush1.msra.mxu0 %v123
    %309 = vmatprep.subr.mxu0 0.0
    %310 = vmatpush1.msra.mxu0 %v124
    %311 = vmatprep.subr.mxu0 0.0
    %312 = vmatpush1.msra.mxu0 %v125
    %313 = vmatprep.subr.mxu0 0.0
    %314 = vmatpush1.msra.mxu0 %v126
    %315 = vmatprep.subr.mxu0 0.0
    %316 = vmatpush1.msra.mxu0 %v127
    %317 = vmatprep.subr.mxu0 0.0
    %318 = vmatpush1.msra.mxu0 %v128
    %319 = vmatprep.subr.mxu0 0.0
    %320 = vmatpush1.msra.mxu0 %v129
    %321 = vmatprep.subr.mxu0 0.0
    %322 = vmatpush1.msra.mxu0 %v130
    %323 = vmatprep.subr.mxu0 0.0
    %324 = vmatpush1.msra.mxu0 %v131
    %325 = vmatprep.subr.mxu0 0.0
    %326 = vmatpush1.msra.mxu0 %v132
    %327 = vmatprep.subr.mxu0 0.0
    %328 = vmatpush1.msra.mxu0 %v133
    %329 = vmatprep.subr.mxu0 0.0
    %330 = vmatpush1.msra.mxu0 %v134
    %331 = vmatprep.subr.mxu0 0.0
    %332 = vmatpush1.msra.mxu0 %v135
    %333 = vmatprep.subr.mxu0 0.0
    %334 = vmatpush1.msra.mxu0 %v136
    %335 = vmatprep.subr.mxu0 0.0
    %336 = vmatpush1.msra.mxu0 %v137
    %337 = vmatprep.subr.mxu0 0.0
    %338 = vmatpush1.msra.mxu0 %v138
    %339 = vmatprep.subr.mxu0 0.0
    %340 = vmatpush1.msra.mxu0 %v139
    %341 = vmatprep.subr.mxu0 0.0
    %342 = vmatpush1.msra.mxu0 %v140
    %343 = vmatprep.subr.mxu0 0.0
    %344 = vmatpush1.msra.mxu0 %v141
    %345 = vmatprep.subr.mxu0 0.0
    %346 = vmatpush1.msra.mxu0 %v142
    %347 = vmatprep.subr.mxu0 0.0
    %348 = vmatpush1.msra.mxu0 %v143
    %349 = vmatprep.subr.mxu0 0.0
    %350 = vmatpush1.msra.mxu0 %v144
    %351 = vmatprep.subr.mxu0 0.0
    %352 = vmatpush1.msra.mxu0 %v145
    %353 = vmatprep.subr.mxu0 0.0
    %354 = vmatpush1.msra.mxu0 %v146
    %355 = vmatprep.subr.mxu0 0.0
    %356 = vmatpush1.msra.mxu0 %v147
    %357 = vmatprep.subr.mxu0 0.0
    %358 = vmatpush1.msra.mxu0 %v148
    %359 = vmatprep.mubr.f32.mxu0 %v72
    %360 = vmatmul.mubr.f32.gmra.mrb[0].mxu0 %v71
    %v361 = vpop.f32.mrb[0].mxu0
    %v362 = vadd.f32 %v287, %v361
    %v363 = vpop.f32.mrb[0].mxu0
    %364 = vmatprep.mubr.f32.mxu0 %v80
    %365 = vmatmul.mubr.f32.gmra.mrb[0].mxu0 %v79
    %v366 = vpop.f32.mrb[0].mxu0
    %v367 = vadd.f32 %v292, %v366
    %v368 = vpop.f32.mrb[0].mxu0
    %369 = vdwg.mxu0
    %370 = vmatprep.subr.mxu0 0.0
    %371 = vmatpush1.msra.mxu0 %v149
    %372 = vmatprep.subr.mxu0 0.0
    %373 = vmatpush1.msra.mxu0 %v150
    %374 = vmatprep.subr.mxu0 0.0
    %375 = vmatpush1.msra.mxu0 %v151
    %376 = vmatprep.subr.mxu0 0.0
    %377 = vmatpush1.msra.mxu0 %v152
    %378 = vmatprep.subr.mxu0 0.0
    %379 = vmatpush1.msra.mxu0 %v153
    %380 = vmatprep.subr.mxu0 0.0
    %381 = vmatpush1.msra.mxu0 %v154
    %382 = vmatprep.subr.mxu0 0.0
    %383 = vmatpush1.msra.mxu0 %v155
    %384 = vmatprep.subr.mxu0 0.0
    %385 = vmatpush1.msra.mxu0 %v156
    %386 = vmatprep.subr.mxu0 0.0
    %387 = vmatpush1.msra.mxu0 %v157
    %388 = vmatprep.subr.mxu0 0.0
    %389 = vmatpush1.msra.mxu0 %v158
    %390 = vmatprep.subr.mxu0 0.0
    %391 = vmatpush1.msra.mxu0 %v159
    %392 = vmatprep.subr.mxu0 0.0
    %393 = vmatpush1.msra.mxu0 %v160
    %394 = vmatprep.subr.mxu0 0.0
    %395 = vmatpush1.msra.mxu0 %v161
    %396 = vmatprep.subr.mxu0 0.0
    %397 = vmatpush1.msra.mxu0 %v162
    %398 = vmatprep.subr.mxu0 0.0
    %399 = vmatpush1.msra.mxu0 %v163
    %400 = vmatprep.subr.mxu0 0.0
    %401 = vmatpush1.msra.mxu0 %v164
    %402 = vmatprep.subr.mxu0 0.0
    %403 = vmatpush1.msra.mxu0 %v165
    %404 = vmatprep.subr.mxu0 0.0
    %405 = vmatpush1.msra.mxu0 %v166
    %406 = vmatprep.subr.mxu0 0.0
    %407 = vmatpush1.msra.mxu0 %v167
    %408 = vmatprep.subr.mxu0 0.0
    %409 = vmatpush1.msra.mxu0 %v168
    %410 = vmatprep.subr.mxu0 0.0
    %411 = vmatpush1.msra.mxu0 %v169
    %412 = vmatprep.subr.mxu0 0.0
    %413 = vmatpush1.msra.mxu0 %v170
    %414 = vmatprep.subr.mxu0 0.0
    %415 = vmatpush1.msra.mxu0 %v171
    %416 = vmatprep.subr.mxu0 0.0
    %417 = vmatpush1.msra.mxu0 %v172
    %418 = vmatprep.subr.mxu0 0.0
    %419 = vmatpush1.msra.mxu0 %v173
    %420 = vmatprep.subr.mxu0 0.0
    %421 = vmatpush1.msra.mxu0 %v174
    %422 = vmatprep.subr.mxu0 0.0
    %423 = vmatpush1.msra.mxu0 %v175
    %424 = vmatprep.subr.mxu0 0.0
    %425 = vmatpush1.msra.mxu0 %v176
    %426 = vmatprep.subr.mxu0 0.0
    %427 = vmatpush1.msra.mxu0 %v177
    %428 = vmatprep.subr.mxu0 0.0
    %429 = vmatpush1.msra.mxu0 %v178
    %430 = vmatprep.subr.mxu0 0.0
    %431 = vmatpush1.msra.mxu0 %v179
    %432 = vmatprep.subr.mxu0 0.0
    %433 = vmatpush1.msra.mxu0 %v180
    %434 = vmatprep.mubr.f32.mxu0 %v74
    %435 = vmatmul.mubr.f32.gmra.mrb[0].mxu0 %v73
    %v436 = vpop.f32.mrb[0].mxu0
    %v437 = vadd.f32 %v362, %v436
    %v438 = vpop.f32.mrb[0].mxu0
    %439 = vmatprep.mubr.f32.mxu0 %v82
    %440 = vmatmul.mubr.f32.gmra.mrb[0].mxu0 %v81
    %v441 = vpop.f32.mrb[0].mxu0
    %v442 = vadd.f32 %v367, %v441
    %v443 = vpop.f32.mrb[0].mxu0
    %444 = vdwg.mxu0
    %445 = vmatprep.subr.mxu0 0.0
    %446 = vmatpush1.msra.mxu0 %v181
    %447 = vmatprep.subr.mxu0 0.0
    %448 = vmatpush1.msra.mxu0 %v182
    %449 = vmatprep.subr.mxu0 0.0
    %450 = vmatpush1.msra.mxu0 %v183
    %451 = vmatprep.subr.mxu0 0.0
    %452 = vmatpush1.msra.mxu0 %v184
    %453 = vmatprep.subr.mxu0 0.0
    %454 = vmatpush1.msra.mxu0 %v185
    %455 = vmatprep.subr.mxu0 0.0
    %456 = vmatpush1.msra.mxu0 %v186
    %457 = vmatprep.subr.mxu0 0.0
    %458 = vmatpush1.msra.mxu0 %v187
    %459 = vmatprep.subr.mxu0 0.0
    %460 = vmatpush1.msra.mxu0 %v188
    %461 = vmatprep.subr.mxu0 0.0
    %462 = vmatpush1.msra.mxu0 %v189
    %463 = vmatprep.subr.mxu0 0.0
    %464 = vmatpush1.msra.mxu0 %v190
    %465 = vmatprep.subr.mxu0 0.0
    %466 = vmatpush1.msra.mxu0 %v191
    %467 = vmatprep.subr.mxu0 0.0
    %468 = vmatpush1.msra.mxu0 %v192
    %469 = vmatprep.subr.mxu0 0.0
    %470 = vmatpush1.msra.mxu0 %v193
    %471 = vmatprep.subr.mxu0 0.0
    %472 = vmatpush1.msra.mxu0 %v194
    %473 = vmatprep.subr.mxu0 0.0
    %474 = vmatpush1.msra.mxu0 %v195
    %475 = vmatprep.subr.mxu0 0.0
    %476 = vmatpush1.msra.mxu0 %v196
    %477 = vmatprep.subr.mxu0 0.0
    %478 = vmatpush1.msra.mxu0 %v197
    %479 = vmatprep.subr.mxu0 0.0
    %480 = vmatpush1.msra.mxu0 %v198
    %481 = vmatprep.subr.mxu0 0.0
    %482 = vmatpush1.msra.mxu0 %v199
    %483 = vmatprep.subr.mxu0 0.0
    %484 = vmatpush1.msra.mxu0 %v200
    %485 = vmatprep.subr.mxu0 0.0
    %486 = vmatpush1.msra.mxu0 %v201
    %487 = vmatprep.subr.mxu0 0.0
    %488 = vmatpush1.msra.mxu0 %v202
    %489 = vmatprep.subr.mxu0 0.0
    %490 = vmatpush1.msra.mxu0 %v203
    %491 = vmatprep.subr.mxu0 0.0
    %492 = vmatpush1.msra.mxu0 %v204
    %493 = vmatprep.subr.mxu0 0.0
    %494 = vmatpush1.msra.mxu0 %v205
    %495 = vmatprep.subr.mxu0 0.0
    %496 = vmatpush1.msra.mxu0 %v206
    %497 = vmatprep.subr.mxu0 0.0
    %498 = vmatpush1.msra.mxu0 %v207
    %499 = vmatprep.subr.mxu0 0.0
    %500 = vmatpush1.msra.mxu0 %v208
    %501 = vmatprep.subr.mxu0 0.0
    %502 = vmatpush1.msra.mxu0 %v209
    %503 = vmatprep.subr.mxu0 0.0
    %504 = vmatpush1.msra.mxu0 %v210
    %505 = vmatprep.subr.mxu0 0.0
    %506 = vmatpush1.msra.mxu0 %v211
    %507 = vmatprep.subr.mxu0 0.0
    %508 = vmatpush1.msra.mxu0 %v212
    %509 = vmatprep.mubr.f32.mxu0 %v76
    %510 = vmatmul.mubr.f32.gmra.mrb[0].mxu0 %v75
    %v511 = vpop.f32.mrb[0].mxu0
    %v512 = vadd.f32 %v437, %v511
    %v513 = vpop.f32.mrb[0].mxu0
    %514 = vmatprep.mubr.f32.mxu0 %v84
    %515 = vmatmul.mubr.f32.gmra.mrb[0].mxu0 %v83
    %v516 = vpop.f32.mrb[0].mxu0
    %v517 = vadd.f32 %v442, %v516
    %v518 = vpop.f32.mrb[0].mxu0
    %519 = vdwg.mxu0
    %vm520 = vcmp.gt.f32.partialorder %v512, 0.0
    %vm521 = vcmp.gt.f32.partialorder %v517, 0.0
    %v522 = vmul.f32 %v512, 0.2
    %v523 = vmul.f32 %v517, 0.2
    %v524 = vsel %vm520, %v512, %v522
    %v525 = vsel %vm521, %v517, %v523
    %v526 = vld [vmem:[#allocation7] sm:$0xff]
    %v527 = vld [vmem:[#allocation7 + $0x8] sm:$0xff]
    %v528 = vld [vmem:[#allocation7 + $0x10] sm:$0xff]
    %v529 = vld [vmem:[#allocation7 + $0x18] sm:$0xff]
    %v530 = vld [vmem:[#allocation7 + $0x20] sm:$0xff]
    %v531 = vld [vmem:[#allocation7 + $0x28] sm:$0xff]
    %v532 = vld [vmem:[#allocation7 + $0x30] sm:$0xff]
    %v533 = vld [vmem:[#allocation7 + $0x38] sm:$0xff]
    %v534 = vld [vmem:[#allocation7 + $0x40] sm:$0xff]
    %v535 = vld [vmem:[#allocation7 + $0x48] sm:$0xff]
    %v536 = vld [vmem:[#allocation7 + $0x50] sm:$0xff]
    %v537 = vld [vmem:[#allocation7 + $0x58] sm:$0xff]
    %v538 = vld [vmem:[#allocation7 + $0x60] sm:$0xff]
    %v539 = vld [vmem:[#allocation7 + $0x68] sm:$0xff]
    %v540 = vld [vmem:[#allocation7 + $0x70] sm:$0xff]
    %v541 = vld [vmem:[#allocation7 + $0x78] sm:$0xff]
    %v542 = vld [vmem:[%s4] sm:$0x1]
    %v544 = vlaneseq
    %v545 = vshrl.u32 %v544, 7
    %v546 = vsub.s32 0, %v545
    %v547 = vrot.slane %v542, %v546
    %549 = vmatprep.subr.mxu0 0.0
    %550 = vmatpush1.msra.mxu0 %v526
    %551 = vmatprep.subr.mxu0 0.0
    %552 = vmatpush1.msra.mxu0 %v527
    %553 = vmatprep.subr.mxu0 0.0
    %554 = vmatpush1.msra.mxu0 %v528
    %555 = vmatprep.subr.mxu0 0.0
    %556 = vmatpush1.msra.mxu0 %v529
    %557 = vmatprep.subr.mxu0 0.0
    %558 = vmatpush1.msra.mxu0 %v530
    %559 = vmatprep.subr.mxu0 0.0
    %560 = vmatpush1.msra.mxu0 %v531
    %561 = vmatprep.subr.mxu0 0.0
    %562 = vmatpush1.msra.mxu0 %v532
    %563 = vmatprep.subr.mxu0 0.0
    %564 = vmatpush1.msra.mxu0 %v533
    %565 = vmatprep.subr.mxu0 0.0
    %566 = vmatpush1.msra.mxu0 %v534
    %567 = vmatprep.subr.mxu0 0.0
    %568 = vmatpush1.msra.mxu0 %v535
    %569 = vmatprep.subr.mxu0 0.0
    %570 = vmatpush1.msra.mxu0 %v536
    %571 = vmatprep.subr.mxu0 0.0
    %572 = vmatpush1.msra.mxu0 %v537
    %573 = vmatprep.subr.mxu0 0.0
    %574 = vmatpush1.msra.mxu0 %v538
    %575 = vmatprep.subr.mxu0 0.0
    %576 = vmatpush1.msra.mxu0 %v539
    %577 = vmatprep.subr.mxu0 0.0
    %578 = vmatpush1.msra.mxu0 %v540
    %579 = vmatprep.subr.mxu0 0.0
    %580 = vmatpush1.msra.mxu0 %v541
    %581 = vmatprep.subr.mxu0 0.0
    %582 = vmatpush1.msra.mxu0 0.0
    %583 = vmatprep.subr.mxu0 0.0
    %584 = vmatpush1.msra.mxu0 0.0
    %585 = vmatprep.subr.mxu0 0.0
    %586 = vmatpush1.msra.mxu0 0.0
    %587 = vmatprep.subr.mxu0 0.0
    %588 = vmatpush1.msra.mxu0 0.0
    %589 = vmatprep.subr.mxu0 0.0
    %590 = vmatpush1.msra.mxu0 0.0
    %591 = vmatprep.subr.mxu0 0.0
    %592 = vmatpush1.msra.mxu0 0.0
    %593 = vmatprep.subr.mxu0 0.0
    %594 = vmatpush1.msra.mxu0 0.0
    %595 = vmatprep.subr.mxu0 0.0
    %596 = vmatpush1.msra.mxu0 0.0
    %597 = vmatprep.subr.mxu0 0.0
    %598 = vmatpush1.msra.mxu0 0.0
    %599 = vmatprep.subr.mxu0 0.0
    %600 = vmatpush1.msra.mxu0 0.0
    %601 = vmatprep.subr.mxu0 0.0
    %602 = vmatpush1.msra.mxu0 0.0
    %603 = vmatprep.subr.mxu0 0.0
    %604 = vmatpush1.msra.mxu0 0.0
    %605 = vmatprep.subr.mxu0 0.0
    %606 = vmatpush1.msra.mxu0 0.0
    %607 = vmatprep.subr.mxu0 0.0
    %608 = vmatpush1.msra.mxu0 0.0
    %609 = vmatprep.subr.mxu0 0.0
    %610 = vmatpush1.msra.mxu0 0.0
    %611 = vmatprep.subr.mxu0 0.0
    %612 = vmatpush1.msra.mxu0 0.0
    %613 = vmatprep.mubr.f32.mxu0 0.0
    %614 = vmatmul.mubr.f32.gmra.mrb[0].mxu0 %v524
    %v615 = vpop.f32.mrb[0].mxu0
    %v616 = vadd.f32 %v547, %v615
    %v617 = vpop.f32.mrb[0].mxu0
    %618 = vmatprep.mubr.f32.mxu0 0.0
    %619 = vmatmul.mubr.f32.gmra.mrb[0].mxu0 %v525
    %v620 = vpop.f32.mrb[0].mxu0
    %v621 = vadd.f32 %v547, %v620
    %v622 = vpop.f32.mrb[0].mxu0
    %623 = vdwg.mxu0
    %vm624 = vcmp.gt.f32.partialorder %v616, 0.0
    %vm625 = vcmp.gt.f32.partialorder %v621, 0.0
    %v626 = vmul.f32 %v616, 0.2
    %v627 = vmul.f32 %v621, 0.2
    %v628 = vsel %vm624, %v616, %v626
    %v629 = vsel %vm625, %v621, %v627
    %v630 = vld [vmem:[%s5] sm:$0x1]
    %v632 = vlaneseq
    %v633 = vshrl.u32 %v632, 7
    %v634 = vsub.s32 0, %v633
    %v635 = vrot.slane %v630, %v634
    %v637 = vmul.f32 %v628, %v635
    %v638 = vmul.f32 %v629, %v635
    %639 = vadd.xlane.f32.xlu0 %v637
    %v640 = vpop.xlane.xlu0 %639
    %641 = vadd.xlane.f32.xlu0 %v638
    %v642 = vpop.xlane.xlu0 %641
    %v643 = vld [vmem:[#allocation2] sm:$0x1]
    %v645 = vlaneseq
    %v646 = vshrl.u32 %v645, 7
    %v647 = vsub.s32 0, %v646
    %v648 = vrot.slane %v643, %v647
    %v650 = vadd.f32 %v640, %v648
    %v651 = vadd.f32 %v642, %v648
    %v652 = vxor.u32 %v650, 2147483648
    %v653 = vxor.u32 %v651, 2147483648
    %v654 = vmul.f32 %v652, 1.442695
    %v655 = vpow.pop %v654
    %v656 = vmul.f32 %v653, 1.442695
    %v657 = vpow.pop %v656
    %v658 = vadd.f32 %v655, 1.0
    %v659 = vadd.f32 %v657, 1.0
    %v660 = vrcp.pop %v658
    %v661 = vmul.f32 1.0, %v660
    %v662 = vrcp.pop %v659
    %v663 = vmul.f32 1.0, %v662
    %vm664 = vcmask 7168
    %665 = vst.msk [vmem:[%s7] sm:$0xff] %vm664, %v661
    %666 = vst.msk [vmem:[%s7 + $0x8] sm:$0xff] %vm664, %v663
    // Predicated region
    $region42: #{tpu_custom_call.1} parent=1 // pred_check
      _
    $region43: #{tpu_custom_call.1} parent=1 // pred_check_branch
      %668 = sbr.rel (0) target = $region45
    $region44: #{tpu_custom_call.1} parent=1 // pred_region
      _
    $region45: #{tpu_custom_call.1} parent=1 // pred_fallthru
      _
    // Predicated region
    $region46: #{tpu_custom_call.1} parent=1 // pred_check
      _
    $region47: #{tpu_custom_call.1} parent=1 // pred_check_branch
      %670 = sbr.rel (0) target = $region49
    $region48: #{tpu_custom_call.1} parent=1 // pred_region
      _
    $region49: #{tpu_custom_call.1} parent=1 // pred_fallthru
      _
    %671 = vsyncpa [#allocation4], 1
    %672 = vsyncpa [#allocation6], 1

</llo_original>
